<compile_context>
chip_gen: v5e
topology: v5e:2x2
jax: 0.10.0
libtpu: 0.0.40
codegen_flags: <defaults>
</compile_context>

<pallas_src>
from functools import partial

import numpy as np
import jax
import jax.numpy as jnp
from jax import lax
from jax.experimental import pallas as pl
from jax.experimental.pallas import tpu as pltpu


# ----------------------------------------------------------------------------
# small helpers
# ----------------------------------------------------------------------------
def _round_up(x: int, m: int) -> int:
    return ((x + m - 1) // m) * m


def _cdiv(a: int, b: int) -> int:
    return -(-a // b)


_VMEM_CAP = None


def _vmem_capacity_bytes() -> int:
    """Trace-time hardware query with a conservative fallback (v7x per-TC)."""
    global _VMEM_CAP
    if _VMEM_CAP is None:
        try:
            _VMEM_CAP = int(pltpu.get_tpu_info().vmem_capacity_bytes)
        except Exception:
            _VMEM_CAP = 64 * 1024 * 1024
    return _VMEM_CAP


def _plan_tiles(B: int, N_pad: int, L: int):
    """Pick (n_split, k_per_split, tile_l, vmem_limit_bytes) for the Gram kernel."""
    vmem = _vmem_capacity_bytes()
    # Per-input-block cap: 8 MiB on big-VMEM chips (v5e/v6e: 128 MiB physical),
    # 4 MiB on smaller ones (v7x: 64 MiB physical / 32 MiB scoped default).
    block_cap = (8 << 20) if vmem >= (96 << 20) else (4 << 20)
    max_tile = max(512, (block_cap // (N_pad * 2)) // 128 * 128)

    L128 = _round_up(L, 128)
    num_tiles = _cdiv(L128, max_tile)

    # v7x megacore: with a single image the batch axis cannot shard across the
    # two TensorCores, so split the reduction into two "parallel" partial Grams
    # (summed in XLA afterwards).  Costs nothing meaningful on 1-TC chips.
    n_split = 1
    if B == 1 and num_tiles >= 2:
        n_split = 2
        num_tiles = _round_up(num_tiles, 2)

    # Near-equal tiles (128-lane granularity): padding waste <= 128*num_tiles.
    tile_l = _round_up(_cdiv(L128, num_tiles), 128)
    k_per_split = num_tiles // n_split

    in_block = N_pad * tile_l * 2        # bf16 input block
    out_block = N_pad * N_pad * 4        # f32 accumulator block
    vmem_limit = 2 * in_block + 2 * out_block + (8 << 20)   # dbl-buffer + headroom
    vmem_limit = max(16 << 20, min(vmem_limit, vmem // 2))
    return n_split, k_per_split, tile_l, vmem_limit


# ----------------------------------------------------------------------------
# Pallas kernel: batched pairwise mask intersection (Gram) matrix I_b = M_b M_b^T
# Grid = (split, batch, pixel-tile).  The output block index is constant along
# the reduction (last) axis, so it stays resident in VMEM and is the accumulator.
# ----------------------------------------------------------------------------
def _mask_gram_kernel(m_ref, inter_ref):
    @pl.when(pl.program_id(2) == 0)
    def _():
        inter_ref[...] = jnp.zeros_like(inter_ref)

    m = m_ref[...]  # (N_pad, tile_l) bf16, entries in {0, 1}
    # Contract the pixel (lane) axis of both operands -> (N_pad, N_pad) block,
    # accumulated in f32 on the MXU.  Same contraction pattern as the attention
    # q.k^T idiom ('qd,kd->qk').
    # TODO(synk): verify in the bundle dump that Mosaic does not emit a full
    # vxpose of the streamed tile for the RHS; if it does, drive the MXU with
    # matmul_push_rhs instead.
    inter_ref[...] += lax.dot_general(
        m, m, (((1,), (1,)), ((), ())), preferred_element_type=jnp.float32
    )


def mask_pairwise_intersections(masks, *, n_split, k_per_split, tile_l, vmem_limit):
    """masks: (B, N_pad, L_pad) bf16 with 0/1 values, L_pad = n_split*k_per_split*tile_l.
    Returns (B, N_pad, N_pad) f32 pairwise intersection counts (diag = areas)."""
    B, N_pad, L_pad = masks.shape
    assert L_pad == n_split * k_per_split * tile_l

    out = pl.pallas_call(
        _mask_gram_kernel,
        out_shape=jax.ShapeDtypeStruct((n_split * B, N_pad, N_pad), jnp.float32),
        grid_spec=pl.GridSpec(
            grid=(n_split, B, k_per_split),
            in_specs=[
                pl.BlockSpec(
                    (None, N_pad, tile_l),
                    lambda s, b, k: (b, 0, s * k_per_split + k),
                )
            ],
            out_specs=pl.BlockSpec(
                (None, N_pad, N_pad),
                lambda s, b, k: (s * B + b, 0, 0),
            ),
        ),
        compiler_params=pltpu.CompilerParams(
            dimension_semantics=("parallel", "parallel", "arbitrary"),
            vmem_limit_bytes=vmem_limit,
        ),
    )(masks)

    if n_split == 1:
        return out
    return out.reshape(n_split, B, N_pad, N_pad).sum(axis=0)


# ----------------------------------------------------------------------------
# Device-side predictor stand-in + Gram statistics (single jitted call).
# ----------------------------------------------------------------------------
def _build_masks_and_boxes(key, B, n_masks, H, W, N_pad, L_pad):
    """Synthetic rectangular masks, generated directly on device in the padded
    (B, N_pad, L_pad) bf16 layout the kernel consumes (no separate pad pass)."""
    k0, k1, k2, k3 = jax.random.split(key, 4)
    x1 = jax.random.randint(k0, (B, n_masks), 0, max(W // 2, 1))
    y1 = jax.random.randint(k1, (B, n_masks), 0, max(H // 2, 1))
    w = jax.random.randint(k2, (B, n_masks), 2, max(W // 2, 3))
    h = jax.random.randint(k3, (B, n_masks), 2, max(H // 2, 3))
    x2 = jnp.minimum(x1 + w, W)
    y2 = jnp.minimum(y1 + h, H)
    bboxes = jnp.stack([x1, y1, x2, y2], axis=-1).astype(jnp.float32)  # (B, n, 4)

    # Pad the box set with degenerate (zero-area) boxes and the pixel axis with
    # out-of-image coordinates, so the generated mask array is born zero-padded.
    boxes_pad = jnp.zeros((B, N_pad, 4), jnp.float32).at[:, :n_masks, :].set(bboxes)
    p = jnp.arange(L_pad, dtype=jnp.int32)
    valid = p < (H * W)
    xs = jnp.where(valid, p % W, -1).astype(jnp.float32)  # (L_pad,)
    ys = jnp.where(valid, p // W, -1).astype(jnp.float32)

    bx1 = boxes_pad[:, :, 0][:, :, None]
    by1 = boxes_pad[:, :, 1][:, :, None]
    bx2 = boxes_pad[:, :, 2][:, :, None]
    by2 = boxes_pad[:, :, 3][:, :, None]
    m = (xs >= bx1) & (xs < bx2) & (ys >= by1) & (ys < by2)  # (B, N_pad, L_pad)
    return m.astype(jnp.bfloat16), bboxes


@partial(jax.jit, static_argnums=(1, 2, 3, 4))
def _predict_and_gram(key, B, n_masks, H, W):
    # TODO(synk): real LangSAM_model.predict (GroundingDINO + SAM) is an external
    # checkpointed model with no in-script equivalent; replaced by deterministic
    # rectangular masks + matching (x1, y1, x2, y2) boxes, generated on device.
    N_pad = _round_up(max(n_masks, 1), 16)  # bf16-friendly sublane multiple
    L = H * W
    n_split, k_per_split, tile_l, vmem_limit = _plan_tiles(B, N_pad, L)
    L_pad = n_split * k_per_split * tile_l

    masks, bboxes = _build_masks_and_boxes(key, B, n_masks, H, W, N_pad, L_pad)
    inter = mask_pairwise_intersections(
        masks,
        n_split=n_split,
        k_per_split=k_per_split,
        tile_l=tile_l,
        vmem_limit=vmem_limit,
    )
    return masks, bboxes, inter[:, :n_masks, :n_masks]


# ----------------------------------------------------------------------------
# LangSAM equivalent
# ----------------------------------------------------------------------------
class LangSAMPallas:
    """Reproduces LangSAM.forward semantics with a synthetic mask predictor."""

    def __init__(self, n_masks: int = 8, seed: int = 0):
        self.n_masks = n_masks
        self.key = jax.random.PRNGKey(seed)

    # ---- suppression logic (faithful to the torch code, including its use of
    #      list-position indices into the already (x,y,w,h)-converted boxes) ---
    def background_suppression(self, idxs, bboxes, height, width, threshold=0.95):
        idxs = [idxs[i] for i in range(len(idxs)) if bboxes[i, 3] / height <= threshold]
        idxs = [idxs[i] for i in range(len(idxs)) if bboxes[i, 2] / width <= threshold]
        return idxs

    def subpart_suppression(self, idxs, inter, areas, threshold=0.2):
        remove_idxs = []
        for a in range(len(idxs)):
            curr_area = areas[idxs[a]]
            for b in range(a + 1, len(idxs)):
                other_area = areas[idxs[b]]
                intersection = inter[idxs[a], idxs[b]]
                if intersection / curr_area > threshold or intersection / other_area > threshold:
                    smaller = a if curr_area < other_area else b
                    remove_idxs.append(smaller)
        keep = [a for a in range(len(idxs)) if a not in remove_idxs]
        return [idxs[a] for a in keep]

    def small_obj_suppression(self, idxs, areas, img_area, threshold=0.005):
        return [i for i in idxs if areas[i] / img_area >= threshold]

    # ---- forward -------------------------------------------------------------
    def forward(self, x: dict):
        images = np.asarray(x["images"])
        if images.ndim == 3:
            images = images[None]
        bs, H, W = images.shape[0], images.shape[1], images.shape[2]
        out_masks = np.zeros(images.shape[:-1], dtype=np.float32)

        # One device call: synthetic predictor + batched Pallas Gram kernel.
        # Only the tiny boxes / NxN intersection matrices and the single
        # selected mask per image cross the host boundary.
        masks_dev, bboxes_dev, inter_dev = _predict_and_gram(
            self.key, bs, self.n_masks, H, W
        )
        jax.block_until_ready(inter_dev)
        bbox_all = np.asarray(bboxes_dev)   # (B, N, 4) f32
        inter_all = np.asarray(inter_dev)   # (B, N, N) f32

        for image_id in range(bs):
            bbox_np = bbox_all[image_id].copy()
            bbox_np[:, 2:] = bbox_np[:, 2:] - bbox_np[:, :2]  # (x1,y1,x2,y2)->(x,y,w,h)

            inter = inter_all[image_id]
            areas = np.diag(inter)

            idxs = list(range(self.n_masks))
            if self.n_masks > 1:
                idxs = self.background_suppression(idxs, bbox_np, H, W)
                idxs = self.subpart_suppression(idxs, inter, areas)
                idxs = self.small_obj_suppression(idxs, areas, H * W)
            if not idxs:
                # the original torch code would raise IndexError here; keep a
                # defined output instead of crashing
                idxs = [0]

            # Pull only the selected mask from device (exact 0/1 values in bf16).
            sel = np.asarray(masks_dev[image_id, idxs[0], : H * W]).astype(np.float32)
            out_masks[image_id, :, :] = sel.reshape(H, W)

        if out_masks.shape[0] == 1:
            return out_masks[0]
        return out_masks

    __call__ = forward


if __name__ == "__main__":
    key = jax.random.PRNGKey(0)
    # small NHWC uint8 "RGB image" batch, consistent with the module's input
    images = np.array(
        jax.random.randint(key, (2, 16, 16, 3), 0, 256, dtype=jnp.int32),
        dtype=np.uint8,
    )
    x = {"images": images, "texts": "everything"}

    model = LangSAMPallas(n_masks=8, seed=0)
    masks = model(x)

    assert masks.shape == (2, 16, 16), masks.shape
    assert np.isfinite(masks).all()
    print("KERNEL_OK")
</pallas_src>

<mosaic_0001>
module attributes {stable_mosaic.version = 11 : i64} {
  func.func @_mask_gram_kernel(%arg0: i32, %arg1: i32, %arg2: i32, %arg3: memref<1x16x256xbf16, #tpu.memory_space<vmem>>, %arg4: memref<1x16x16xf32, #tpu.memory_space<vmem>>) attributes {dimension_semantics = [#tpu.dimension_semantics<parallel>, #tpu.dimension_semantics<parallel>, #tpu.dimension_semantics<arbitrary>], iteration_bounds = array<i64: 1, 2, 1>, scalar_prefetch = 0 : i64, scratch_operands = 0 : i64, tpu.core_type = #tpu.core_type<tc>, window_params = [{transform_indices = @transform_0, window_bounds = array<i64: 1, 16, 256>}, {transform_indices = @transform_1, window_bounds = array<i64: 1, 16, 16>}]} {
    %c0_i32 = arith.constant 0 : i32
    %0 = arith.cmpi eq, %arg2, %c0_i32 : i32
    %1 = arith.extui %0 : i1 to i32
    %c0_i32_0 = arith.constant 0 : i32
    %2 = arith.cmpi ne, %1, %c0_i32_0 : i32
    scf.if %2 {
      %cst_9 = arith.constant 0.000000e+00 : f32
      %12 = vector.broadcast %cst_9 : f32 to vector<16x16xf32>
      %c0_10 = arith.constant 0 : index
      %c0_11 = arith.constant 0 : index
      %c0_12 = arith.constant 0 : index
      %13 = vector.load %arg4[%c0_10, %c0_11, %c0_12] : memref<1x16x16xf32, #tpu.memory_space<vmem>>, vector<1x16x16xf32>
      %14 = vector.shape_cast %13 : vector<1x16x16xf32> to vector<16x16xf32>
      %15 = vector.shape_cast %12 : vector<16x16xf32> to vector<1x16x16xf32>
      tpu.vector_store %arg4[%c0_10, %c0_11, %c0_12], %15 {strides = array<i32>} : memref<1x16x16xf32, #tpu.memory_space<vmem>>, vector<1x16x16xf32>,
    } else {
    }
    %c0 = arith.constant 0 : index
    %c0_1 = arith.constant 0 : index
    %c0_2 = arith.constant 0 : index
    %3 = vector.load %arg3[%c0, %c0_1, %c0_2] : memref<1x16x256xbf16, #tpu.memory_space<vmem>>, vector<1x16x256xbf16>
    %4 = vector.shape_cast %3 : vector<1x16x256xbf16> to vector<16x256xbf16>
    %c0_3 = arith.constant 0 : index
    %c0_4 = arith.constant 0 : index
    %c0_5 = arith.constant 0 : index
    %5 = vector.load %arg4[%c0_3, %c0_4, %c0_5] : memref<1x16x16xf32, #tpu.memory_space<vmem>>, vector<1x16x16xf32>
    %6 = vector.shape_cast %5 : vector<1x16x16xf32> to vector<16x16xf32>
    %cst = arith.constant dense<0.000000e+00> : vector<16x16xf32>
    %7 = tpu.matmul %4, %4, %cst {dimension_numbers = #tpu.dot_dimension_numbers<[1], [1], [0], [0], [0, 0, 1, 0], [], []>} : vector<16x256xbf16>, vector<16x256xbf16>, vector<16x16xf32> -> vector<16x16xf32>
    %8 = arith.addf %6, %7 : vector<16x16xf32>
    %c0_6 = arith.constant 0 : index
    %c0_7 = arith.constant 0 : index
    %c0_8 = arith.constant 0 : index
    %9 = vector.load %arg4[%c0_6, %c0_7, %c0_8] : memref<1x16x16xf32, #tpu.memory_space<vmem>>, vector<1x16x16xf32>
    %10 = vector.shape_cast %9 : vector<1x16x16xf32> to vector<16x16xf32>
    %11 = vector.shape_cast %8 : vector<16x16xf32> to vector<1x16x16xf32>
    tpu.vector_store %arg4[%c0_6, %c0_7, %c0_8], %11 {strides = array<i32>} : memref<1x16x16xf32, #tpu.memory_space<vmem>>, vector<1x16x16xf32>,
    return
  }
  func.func @transform_0(%arg0: i32, %arg1: i32, %arg2: i32) -> (i32, i32, i32) {
    %c1_i32 = arith.constant 1 : i32
    %0 = arith.muli %arg0, %c1_i32 : i32
    %1 = arith.addi %0, %arg2 : i32
    %c0_i32 = arith.constant 0 : i32
    %c0_i32_0 = arith.constant 0 : i32
    return %arg1, %c0_i32, %1 : i32, i32, i32
  }
  func.func @transform_1(%arg0: i32, %arg1: i32, %arg2: i32) -> (i32, i32, i32) {
    %c2_i32 = arith.constant 2 : i32
    %0 = arith.muli %arg0, %c2_i32 : i32
    %1 = arith.addi %0, %arg1 : i32
    %c0_i32 = arith.constant 0 : i32
    %c0_i32_0 = arith.constant 0 : i32
    %c0_i32_1 = arith.constant 0 : i32
    return %1, %c0_i32, %c0_i32_0 : i32, i32, i32
  }
}

</mosaic_0001>

<llo_original>
// kernel: _predict_and_gram.1
$region0: #{_predict_and_gram.1}
  #allocation0 [shape = 'u32[]', space=smem, size = 0x4, offset = 0x4, fixed_abs, tag = 'smem constant byte address 0x4 - core index']
  #allocation1 [shape = 'u32[72,128]{1,0:T(1,128)}', space=vmem, size = 0x9000, scoped, tag = 'internal scratch']
  %s0 = inlined_call_operand.vmem [shape: bf16[2,16,256], index: 0, kind: input, shape index: {}]
  %s1 = inlined_call_operand.vmem [shape: f32[2,16,16], index: 1, kind: output, shape index: {}]
  %s2 = sld [smem:[#allocation0]]
  $region41: #{_predict_and_gram.1} parent=0
    _
  %s4 = ssub.s32 1, %s2
  %s5 = scalar_select 0, %s4, %s2
  loop: start=0, step=1, limit=4
  $region2: #{_predict_and_gram.1} parent=0 // loop_pre_header
    _
  $region3: #{_predict_and_gram.1} parent=0 // loop_header
    %s7 = sphi 0, %s11
    %p8 = scmp.ge.s32.totalorder %s7, 4
    %s14 = sphi 0, %s33
    %s15 = sphi 0, %s29
    %s16 = sphi 0, %s25
    %s17 = sphi 0, %s14
    %s18 = sphi 0, %s15
    %s19 = sphi 0, %s16
    %s20 = sphi 0, %s17
    %s21 = sphi 0, %s18
    %s22 = sphi 0, %s19
    %s40 = sphi 0, %s42
    %s43 = sphi 0, %s40
    %s44 = sphi 0, %s43
    %s60 = sphi 0, %s44
    %s70 = sphi 0, %s72
    %s73 = sphi 0, %s70
    %s74 = sphi 0, %s73
    %s90 = sphi 0, %s74
  $region4: #{_predict_and_gram.1} parent=0 // loop_header_branch
    %10 = sbr.rel (%p8) target = $region8
  $region5: #{_predict_and_gram.1} parent=0 // loop_body
    %s12 = ssub.s32 %s7, 1
    %s13 = ssub.s32 %s7, 2
    %s23 = sadd.s32 1, %s16
    %p24 = scmp.ge.s32.totalorder %s23, 1
    %s25 = scalar_select %p24, 0, %s23
    %s26 = sadd.s32 1, %s15
    %s27 = scalar_select %p24, %s26, %s15
    %p28 = scmp.ge.s32.totalorder %s27, 2
    %s29 = scalar_select %p28, 0, %s27
    %s30 = sadd.s32 1, %s14
    %s31 = scalar_select %p28, %s30, %s14
    %p32 = scmp.ge.s32.totalorder %s31, 1
    %s33 = scalar_select %p32, 0, %s31
    %s34 = sadd.s32 %s14, %s16
    %s35 = sadd.s32 %s33, %s25
    %s36 = ssub.s32 %s15, %s29
    %s37 = ssub.s32 %s34, %s35
    %s38 = sor.u32 %s36, %s37
    %p39 = scmp.eq.s32.totalorder %s38, 0
    %s41 = sadd.s32 %s40, 1
    %s42 = scalar_select %p39, %s40, %s41
    %p45 = pneg %p39
    %p46 = scmp.eq.s32.totalorder %s7, 1
    %p47 = por %p45, %p46
    %p48 = scmp.ne.s32.totalorder %s40, %s43
    %p49 = scmp.eq.s32.totalorder %s7, 0
    %p50 = por %p48, %p49
    %p51 = scmp.ne.s32.totalorder %s40, %s43
    %p52 = scmp.eq.s32.totalorder %s12, 1
    %p53 = por %p51, %p52
    %p54 = scmp.ne.s32.totalorder %s43, %s44
    %p55 = scmp.eq.s32.totalorder %s12, 0
    %p56 = por %p54, %p55
    %p57 = scmp.ne.s32.totalorder %s43, %s44
    %p58 = scmp.eq.s32.totalorder %s13, 1
    %p59 = por %p57, %p58
    %p61 = scmp.ne.s32.totalorder %s44, %s60
    %p62 = scmp.eq.s32.totalorder %s13, 0
    %p63 = por %p61, %p62
    %s64 = smul.u32 %s14, 2
    %s65 = sadd.s32 %s64, %s15
    %s66 = smul.u32 %s33, 2
    %s67 = sadd.s32 %s66, %s29
    %s68 = ssub.s32 %s65, %s67
    %p69 = scmp.eq.s32.totalorder %s68, 0
    %s71 = sadd.s32 %s70, 1
    %s72 = scalar_select %p69, %s70, %s71
    %p75 = pneg %p69
    %p76 = scmp.eq.s32.totalorder %s7, 1
    %p77 = por %p75, %p76
    %p78 = scmp.ne.s32.totalorder %s70, %s73
    %p79 = scmp.eq.s32.totalorder %s7, 0
    %p80 = por %p78, %p79
    %p81 = scmp.ne.s32.totalorder %s70, %s73
    %p82 = scmp.eq.s32.totalorder %s12, 1
    %p83 = por %p81, %p82
    %p84 = scmp.ne.s32.totalorder %s73, %s74
    %p85 = scmp.eq.s32.totalorder %s12, 0
    %p86 = por %p84, %p85
    %p87 = scmp.ne.s32.totalorder %s73, %s74
    %p88 = scmp.eq.s32.totalorder %s13, 1
    %p89 = por %p87, %p88
    %p91 = scmp.ne.s32.totalorder %s74, %s90
    %p92 = scmp.eq.s32.totalorder %s13, 0
    %p93 = por %p91, %p92
    %p94 = scmp.le.s32.totalorder 1, %s7
    %p95 = scmp.lt.s32.totalorder %s7, 3
    %p96 = pnand %p94, %p95
    %p97 = pneg %p96
    // Predicated region
    $region9: #{_predict_and_gram.1} parent=5 // pred_check
      _
    $region10: #{_predict_and_gram.1} parent=5 // pred_check_branch
      %99 = sbr.rel (%p96) target = $region12
    $region11: #{_predict_and_gram.1} parent=5 // pred_region
      %s100 = ssub.s32 %s7, 1
    $region12: #{_predict_and_gram.1} parent=5 // pred_fallthru
      _
    %p101 = scmp.lt.s32.totalorder %s7, 2
    // Predicated region
    $region13: #{_predict_and_gram.1} parent=5 // pred_check
      %p102 = pneg %p101
    $region14: #{_predict_and_gram.1} parent=5 // pred_check_branch
      %104 = sbr.rel (%p102) target = $region16
    $region15: #{_predict_and_gram.1} parent=5 // pred_region
      // Predicated region
      $region17: #{_predict_and_gram.1} parent=15 // pred_check
        %p105 = pneg %p50
      $region18: #{_predict_and_gram.1} parent=15 // pred_check_branch
        %107 = sbr.rel (%p105) target = $region20
      $region19: #{_predict_and_gram.1} parent=15 // pred_region
        %s108 = sadd.s32 %s14, %s16
        %s109 = smul.u32 2, %s108
        %p110 = scmp.lt.s32.totalorder %s15, 1
        %s111 = scalar_select %p110, %s15, 1
        %p112 = scmp.lt.s32.totalorder %s109, 1
        %s113 = scalar_select %p112, %s109, 1
        %s114 = smul.addr %s111, 4
        %s115 = sadd.s32 %s113, %s114
        %s116 = smul.addr %s115, 4
        %s117 = scalar_lea.vmem %s0, %s116
        %s118 = sadd.s32 %s14, %s16
        %s119 = smul.u32 2, %s118
      $region20: #{_predict_and_gram.1} parent=15 // pred_fallthru
        _
    $region16: #{_predict_and_gram.1} parent=5 // pred_fallthru
      _
    %p120 = scmp.le.s32.totalorder 1, %s7
    %p121 = scmp.lt.s32.totalorder %s7, 3
    %p122 = pnand %p120, %p121
    %p123 = pneg %p122
    // Predicated region
    $region21: #{_predict_and_gram.1} parent=5 // pred_check
      _
    $region22: #{_predict_and_gram.1} parent=5 // pred_check_branch
      %125 = sbr.rel (%p122) target = $region24
    $region23: #{_predict_and_gram.1} parent=5 // pred_region
      %s126 = ssub.s32 %s7, 1
      %s127 = sadd.s32 %s17, %s19
      %s128 = smul.u32 2, %s127
      %p129 = scmp.lt.s32.totalorder %s18, 1
      %s130 = scalar_select %p129, %s18, 1
      %p131 = scmp.lt.s32.totalorder %s128, 1
      %s132 = scalar_select %p131, %s128, 1
      %s133 = smul.addr %s130, 4
      %s134 = sadd.s32 %s132, %s133
      %s135 = smul.addr %s134, 4
      %s136 = scalar_lea.vmem %s0, %s135
      %p137 = pneg %p56
      %p138 = pneg %p53
      %p139 = pneg %p86
      %p140 = pneg %p83
      %s141 = smul.u32 %s17, 2
      %s142 = sadd.s32 %s141, %s18
      %p143 = scmp.lt.s32.totalorder %s142, 1
      %s144 = scalar_select %p143, %s142, 1
      %s145 = smul.addr %s144, 2
      %s146 = smul.addr %s145, 8
      %s147 = scalar_lea.vmem %s1, %s146
      %s148 = sadd.s32 %s17, %s19
      %s149 = smul.u32 2, %s148
      %p150 = scmp.lt.s32.totalorder %s18, 1
      %s151 = scalar_select %p150, %s18, 1
      %p152 = scmp.lt.s32.totalorder %s149, 1
      %s153 = scalar_select %p152, %s149, 1
      %s154 = smul.addr %s151, 4
      %s155 = sadd.s32 %s153, %s154
      %s156 = smul.addr %s155, 4
      %s157 = scalar_lea.vmem %s0, %s156
      %s158 = sadd.s32 %s17, %s19
      %s159 = smul.u32 2, %s158
      %s160 = smul.u32 %s17, 2
      %s161 = sadd.s32 %s160, %s18
      %p162 = scmp.lt.s32.totalorder %s161, 1
      %s163 = scalar_select %p162, %s161, 1
      %s164 = smul.addr %s163, 2
      %s165 = smul.addr %s164, 8
      %s166 = scalar_lea.vmem %s1, %s165
      %s167 = smul.u32 %s17, 2
      %s168 = sadd.s32 %s167, %s18
      %p170 = scmp.eq.s32.totalorder %s19, 0
      // Predicated region
      $region25: #{_predict_and_gram.1} parent=23 // pred_check
        %p171 = pneg %p170
      $region26: #{_predict_and_gram.1} parent=23 // pred_check_branch
        %173 = sbr.rel (%p171) target = $region28
      $region27: #{_predict_and_gram.1} parent=23 // pred_region
        %vm174 = vcmask 130048
        %175 = vst.msk [vmem:[%s166] sm:$0xff] %vm174, 0.0
        %176 = vst.msk [vmem:[%s166 + $0x8] sm:$0xff] %vm174, 0.0
      $region28: #{_predict_and_gram.1} parent=23 // pred_fallthru
        _
      %v177 = vld [vmem:[%s157] sm:$0xff]
      %v178 = vld [vmem:[%s157 + $0x8] sm:$0xff]
      %v179 = vld [vmem:[%s166] sm:$0xff]
      %v180 = vld [vmem:[%s166 + $0x8] sm:$0xff]
      %v183 = vunpack.c.l.b16 %v177
      %v184 = vunpack.c.h.b16 %v177
      %v185 = vunpack.c.l.b16 %v178
      %v186 = vunpack.c.h.b16 %v178
      %v187 = vpack.c.b16 %v185, %v183
      %v188 = vpack.c.b16 %v186, %v184
      %191 = vmatpush.bf16.xpose.msra.mxu0 0
      %192 = vmatpush.bf16.xpose.msra.mxu0 0
      %193 = vmatpush.bf16.xpose.msra.mxu0 0
      %194 = vmatpush.bf16.xpose.msra.mxu0 0
      %195 = vmatpush.bf16.xpose.msra.mxu0 0
      %196 = vmatpush.bf16.xpose.msra.mxu0 0
      %197 = vmatpush.bf16.xpose.msra.mxu0 0
      %198 = vmatpush.bf16.xpose.msra.mxu0 %v187
      %199 = vmatmul.bf16.gmra.mxu0 %v187
      %v200 = vpop.f32.mrf.mxu0
      %v201 = vadd.f32 0.0, %v200
      %v202 = vpop.f32.mrf.mxu0
      %v203 = vadd.f32 0.0, %v202
      %204 = vdwg.mxu0
      %205 = vmatpush.bf16.xpose.msra.mxu0 0
      %206 = vmatpush.bf16.xpose.msra.mxu0 0
      %207 = vmatpush.bf16.xpose.msra.mxu0 0
      %208 = vmatpush.bf16.xpose.msra.mxu0 0
      %209 = vmatpush.bf16.xpose.msra.mxu0 0
      %210 = vmatpush.bf16.xpose.msra.mxu0 0
      %211 = vmatpush.bf16.xpose.msra.mxu0 0
      %212 = vmatpush.bf16.xpose.msra.mxu0 %v188
      %213 = vmatmul.bf16.gmra.mxu0 %v188
      %v214 = vpop.f32.mrf.mxu0
      %v215 = vadd.f32 %v201, %v214
      %v216 = vpop.f32.mrf.mxu0
      %v217 = vadd.f32 %v203, %v216
      %218 = vdwg.mxu0
      %v219 = vadd.f32 %v179, %v215
      %v220 = vadd.f32 %v180, %v217
      %vm221 = vcmask 130048
      %222 = vst.msk [vmem:[%s166] sm:$0xff] %vm221, %v219
      %223 = vst.msk [vmem:[%s166 + $0x8] sm:$0xff] %vm221, %v220
      %s224 = smul.u32 %s17, 2
      %s225 = sadd.s32 %s224, %s18
      %p226 = scmp.lt.s32.totalorder %s225, 1
      %s227 = scalar_select %p226, %s225, 1
      %s228 = smul.addr %s227, 2
      %s229 = smul.addr %s228, 8
      %s230 = scalar_lea.vmem %s1, %s229
      // Predicated region
      $region29: #{_predict_and_gram.1} parent=23 // pred_check
        %p231 = pneg %p83
      $region30: #{_predict_and_gram.1} parent=23 // pred_check_branch
        %233 = sbr.rel (%p231) target = $region32
      $region31: #{_predict_and_gram.1} parent=23 // pred_region
        %s234 = smul.u32 %s17, 2
        %s235 = sadd.s32 %s234, %s18
      $region32: #{_predict_and_gram.1} parent=23 // pred_fallthru
        _
    $region24: #{_predict_and_gram.1} parent=5 // pred_fallthru
      _
    %p236 = scmp.le.s32.totalorder 2, %s7
    // Predicated region
    $region33: #{_predict_and_gram.1} parent=5 // pred_check
      %p237 = pneg %p236
    $region34: #{_predict_and_gram.1} parent=5 // pred_check_branch
      %239 = sbr.rel (%p237) target = $region36
    $region35: #{_predict_and_gram.1} parent=5 // pred_region
      %s240 = ssub.s32 %s7, 2
      // Predicated region
      $region37: #{_predict_and_gram.1} parent=35 // pred_check
        %p241 = pneg %p89
      $region38: #{_predict_and_gram.1} parent=35 // pred_check_branch
        %243 = sbr.rel (%p241) target = $region40
      $region39: #{_predict_and_gram.1} parent=35 // pred_region
        %s244 = smul.u32 %s20, 2
        %s245 = sadd.s32 %s244, %s21
        %p246 = scmp.lt.s32.totalorder %s245, 1
        %s247 = scalar_select %p246, %s245, 1
        %s248 = smul.addr %s247, 2
        %s249 = smul.addr %s248, 8
        %s250 = scalar_lea.vmem %s1, %s249
      $region40: #{_predict_and_gram.1} parent=35 // pred_fallthru
        _
    $region36: #{_predict_and_gram.1} parent=5 // pred_fallthru
      _
  $region6: #{_predict_and_gram.1} parent=0 // loop_footer
    %s11 = sadd.s32 1, %s7
  $region7: #{_predict_and_gram.1} parent=0 // loop_footer_branch
    %6 = sbr.rel target = $region3
  $region8: #{_predict_and_gram.1} parent=0 // loop_exit
    _

</llo_original>
